<compile_context>
chip_gen: v6e
topology: v6e:2x2x1
jax: 0.10.0
libtpu: 0.0.40
codegen_flags: <defaults>
</compile_context>

<pallas_src>
import functools

import jax
import jax.numpy as jnp
from jax import lax
from jax.experimental import pallas as pl
from jax.experimental.pallas import tpu as pltpu


def _round_up(x, m):
    return ((x + m - 1) // m) * m


def _smnist_kernel(x_ref, y_ref, w_ih_ref, w_hh_t_ref, b_ref, w_lin_t_ref,
                   b_lin_ref, logits_ref, loss_ref, correct_ref, h_scratch,
                   *, batch, num_classes, chunk, tail):
    """One grid step == one chunk of RNN time steps (batch-row state layout).

    h_t = tanh(h_{t-1} @ W_hh^T + x_t * w_ih_row + b);  head/loss on last chunk.
    """
    c = pl.program_id(0)
    nc = pl.num_programs(0)
    b_pad, h_pad = h_scratch.shape

    @pl.when(c == 0)
    def _():
        h_scratch[...] = jnp.zeros_like(h_scratch)

    # Hoist loop invariants (JAX does not CSE broadcast_in_dim).
    w_hh_t = w_hh_t_ref[...]                                     # (H_pad, H_pad)
    w_ih_b = jnp.broadcast_to(w_ih_ref[...], (b_pad, h_pad))     # (B_pad, H_pad)
    bias_b = jnp.broadcast_to(b_ref[...], (b_pad, h_pad))        # (B_pad, H_pad)

    def run_steps(n):
        # Static unroll: every x slice is a static lane slice; the drive
        # (mul+add) is independent of h, so only dot->add->tanh is serial.
        h = h_scratch[...]
        for i in range(n):
            x_col = x_ref[:, i:i + 1]                            # (B_pad, 1)
            u = x_col * w_ih_b + bias_b                          # off the chain
            h = jnp.tanh(
                jnp.dot(h, w_hh_t, preferred_element_type=jnp.float32) + u)
        h_scratch[...] = h

    if tail == chunk:
        run_steps(chunk)
    else:
        @pl.when(c < nc - 1)
        def _():
            run_steps(chunk)

        @pl.when(c == nc - 1)
        def _():
            run_steps(tail)      # ragged last chunk: only the valid steps

    @pl.when(c == nc - 1)
    def _():
        h = h_scratch[...]                                       # (B_pad, H_pad)
        logits = (jnp.dot(h, w_lin_t_ref[...],
                          preferred_element_type=jnp.float32)
                  + b_lin_ref[...])                              # (B_pad, C_pad)
        logits_ref[...] = logits

        c_pad = logits.shape[1]
        col = lax.broadcasted_iota(jnp.int32, logits.shape, 1)   # class index
        y = y_ref[...]                                           # (B_pad, 1)

        # mask padded class lanes out of max / softmax
        neg = jnp.float32(-1e30)
        lm = jnp.where(col < num_classes, logits, neg)
        m = jnp.max(lm, axis=1, keepdims=True)                   # (B_pad, 1)
        lse = m + jnp.log(jnp.sum(jnp.exp(lm - m), axis=1, keepdims=True))
        true_logit = jnp.sum(jnp.where(col == y, logits, 0.0),
                             axis=1, keepdims=True)              # (B_pad, 1)
        per_example = lse - true_logit                           # (B_pad, 1)

        # mask padded batch rows; mean-reduce CE like nn.CrossEntropyLoss
        bmask = lax.broadcasted_iota(jnp.int32, per_example.shape, 0) < batch
        loss_ref[...] = (jnp.sum(jnp.where(bmask, per_example, 0.0),
                                 axis=0, keepdims=True)
                         / jnp.float32(batch))

        # argmax (first occurrence) + correct count
        amax = jnp.min(jnp.where(lm == m, col, c_pad),
                       axis=1, keepdims=True)                    # (B_pad, 1)
        hits = jnp.where(bmask & (amax == y), 1, 0).astype(jnp.int32)
        correct_ref[...] = jnp.sum(hits, axis=0, keepdims=True)


def smnist_forward(inputs, y, order, params, *, max_chunk=128):
    """inputs: (B, T) f32 pixel stream, y: (B,) int labels, order: (T,) perm."""
    B, T = inputs.shape
    H = params["w_hh"].shape[0]
    C = params["w_lin"].shape[0]

    B_pad = _round_up(B, 8)
    H_pad = _round_up(max(H, 1), 128)
    C_pad = _round_up(C, 128)            # classes sit on the lane axis now

    # Lane-aligned chunks; ragged tail handled in-kernel (no chunk=1 cliff).
    if T <= max_chunk:
        chunk = T
    else:
        chunk = max(128, (max_chunk // 128) * 128)
    num_chunks = -(-T // chunk)
    T_pad = num_chunks * chunk
    tail = T - (num_chunks - 1) * chunk

    # permuted pixels, batch-major, zero-padded: (B_pad, T_pad)
    x = inputs[:, order].astype(jnp.float32)
    x_bm = jnp.zeros((B_pad, T_pad), jnp.float32).at[:B, :T].set(x)
    y2 = jnp.zeros((B_pad, 1), jnp.int32).at[:B, 0].set(y.astype(jnp.int32))

    # zero-padded parameters, transposed for the batch-row (B, H) layout
    w_ih = jnp.zeros((1, H_pad), jnp.float32).at[0, :H].set(params["w_ih"][:, 0])
    w_hh_t = jnp.zeros((H_pad, H_pad), jnp.float32).at[:H, :H].set(
        params["w_hh"].T)
    b = jnp.zeros((1, H_pad), jnp.float32).at[0, :H].set(
        params["b_ih"] + params["b_hh"])
    w_lin_t = jnp.zeros((H_pad, C_pad), jnp.float32).at[:H, :C].set(
        params["w_lin"].T)
    b_lin = jnp.zeros((1, C_pad), jnp.float32).at[0, :C].set(params["b_lin"])

    kernel = functools.partial(_smnist_kernel, batch=B, num_classes=C,
                               chunk=chunk, tail=tail)
    const = lambda c: (0, 0)

    logits_p, loss, correct = pl.pallas_call(
        kernel,
        out_shape=(jax.ShapeDtypeStruct((B_pad, C_pad), jnp.float32),
                   jax.ShapeDtypeStruct((1, 1), jnp.float32),
                   jax.ShapeDtypeStruct((1, 1), jnp.int32)),
        grid_spec=pltpu.PrefetchScalarGridSpec(
            num_scalar_prefetch=0,
            grid=(num_chunks,),
            in_specs=[
                pl.BlockSpec((B_pad, chunk), lambda c: (0, c)),  # pixel slab
                pl.BlockSpec((B_pad, 1), const),                 # labels
                pl.BlockSpec((1, H_pad), const),                 # w_ih row
                pl.BlockSpec((H_pad, H_pad), const),             # W_hh^T
                pl.BlockSpec((1, H_pad), const),                 # b_ih + b_hh
                pl.BlockSpec((H_pad, C_pad), const),             # W_lin^T
                pl.BlockSpec((1, C_pad), const),                 # b_lin
            ],
            out_specs=(pl.BlockSpec((B_pad, C_pad), const),      # logits
                       pl.BlockSpec((1, 1), const),              # loss
                       pl.BlockSpec((1, 1), const)),             # correct
            scratch_shapes=[pltpu.VMEM((B_pad, H_pad), jnp.float32)],
        ),
        compiler_params=pltpu.CompilerParams(
            dimension_semantics=("arbitrary",)),   # serial time recurrence
    )(x_bm, y2, w_ih, w_hh_t, b, w_lin_t, b_lin)

    logits = logits_p[:B, :C]
    # (loss, correct, hiddens) as in the PyTorch forward; hiddens stays [].
    return loss[0, 0], correct[0, 0], logits, []


def init_params(key, hidden_size, num_classes=10):
    """PyTorch-style uniform(-1/sqrt(H), 1/sqrt(H)) init, natural shapes."""
    H = hidden_size
    ks = jax.random.split(key, 6)
    s = 1.0 / jnp.sqrt(jnp.float32(H))
    u = lambda k, shape: jax.random.uniform(k, shape, jnp.float32, -s, s)
    return dict(
        w_ih=u(ks[0], (H, 1)),              # nn.RNNCell weight_ih (input=1)
        w_hh=u(ks[1], (H, H)),              # weight_hh
        b_ih=u(ks[2], (H,)),
        b_hh=u(ks[3], (H,)),
        w_lin=u(ks[4], (num_classes, H)),   # nn.Linear weight
        b_lin=u(ks[5], (num_classes,)),
    )


def reference(inputs, y, order, params):
    """Pure-JAX reference of the PyTorch forward (for correctness check)."""
    x = inputs[:, order]                       # (B, T)
    B, T = x.shape
    H = params["w_hh"].shape[0]
    b = params["b_ih"] + params["b_hh"]
    w_ih_row = params["w_ih"][:, 0]            # (H,)

    def step(h, xt):                           # xt: (B,)
        h = jnp.tanh(xt[:, None] * w_ih_row[None, :]
                     + h @ params["w_hh"].T + b[None, :])
        return h, None

    h, _ = lax.scan(step, jnp.zeros((B, H), jnp.float32), x.T)
    logits = h @ params["w_lin"].T + params["b_lin"][None, :]
    lse = jax.nn.logsumexp(logits, axis=1)
    tl = logits[jnp.arange(B), y]
    loss = jnp.mean(lse - tl)
    preds = jnp.argmax(logits, axis=1)
    correct = jnp.sum(preds == y)
    return loss, correct, logits


if __name__ == "__main__":
    def run_case(B, T, H, seed, max_chunk, atol):
        key = jax.random.PRNGKey(seed)
        kp, kx, ky, ko = jax.random.split(key, 4)
        params = init_params(kp, H)
        inputs = jax.random.normal(kx, (B, T), dtype=jnp.float32)
        y = jax.random.randint(ky, (B,), 0, 10)
        order = jax.random.permutation(ko, T)

        loss, correct, logits, hiddens = smnist_forward(
            inputs, y, order, params, max_chunk=max_chunk)
        jax.block_until_ready((loss, correct, logits))

        r_loss, r_correct, r_logits = reference(inputs, y, order, params)
        assert jnp.allclose(logits, r_logits, atol=atol, rtol=atol), "logits"
        assert jnp.allclose(loss, r_loss, atol=atol, rtol=atol), "loss"
        assert int(correct) == int(r_correct), "correct count"

    # primary small-shape case (batch=2, seq=8, hidden=32): single time chunk
    run_case(B=2, T=8, H=32, seed=0, max_chunk=128, atol=1e-4)
    # multi-chunk + ragged tail + padding (B=3 -> 8, H=20 -> 128, 128+72 steps)
    run_case(B=3, T=200, H=20, seed=1, max_chunk=128, atol=1e-3)

    print("KERNEL_OK")
</pallas_src>

<mosaic_0001>
module attributes {stable_mosaic.version = 11 : i64} {
  func.func @_smnist_kernel(%arg0: i32, %arg1: memref<8x8xf32, #tpu.memory_space<vmem>>, %arg2: memref<8x1xi32, #tpu.memory_space<vmem>>, %arg3: memref<1x128xf32, #tpu.memory_space<vmem>>, %arg4: memref<128x128xf32, #tpu.memory_space<vmem>>, %arg5: memref<1x128xf32, #tpu.memory_space<vmem>>, %arg6: memref<128x128xf32, #tpu.memory_space<vmem>>, %arg7: memref<1x128xf32, #tpu.memory_space<vmem>>, %arg8: memref<8x128xf32, #tpu.memory_space<vmem>>, %arg9: memref<1x1xf32, #tpu.memory_space<vmem>>, %arg10: memref<1x1xi32, #tpu.memory_space<vmem>>, %arg11: memref<8x128xf32, #tpu.memory_space<vmem>>) attributes {dimension_semantics = [#tpu.dimension_semantics<arbitrary>], iteration_bounds = array<i64: 1>, scalar_prefetch = 0 : i64, scratch_operands = 1 : i64, tpu.core_type = #tpu.core_type<tc>, window_params = [{transform_indices = @transform_0, window_bounds = array<i64: 8, 8>}, {pipeline_mode = #tpu.pipeline_mode<synchronous>, transform_indices = @transform_1, window_bounds = array<i64: 8, 1>}, {pipeline_mode = #tpu.pipeline_mode<synchronous>, transform_indices = @transform_2, window_bounds = array<i64: 1, 128>}, {pipeline_mode = #tpu.pipeline_mode<synchronous>, transform_indices = @transform_3, window_bounds = array<i64: 128, 128>}, {pipeline_mode = #tpu.pipeline_mode<synchronous>, transform_indices = @transform_4, window_bounds = array<i64: 1, 128>}, {pipeline_mode = #tpu.pipeline_mode<synchronous>, transform_indices = @transform_5, window_bounds = array<i64: 128, 128>}, {pipeline_mode = #tpu.pipeline_mode<synchronous>, transform_indices = @transform_6, window_bounds = array<i64: 1, 128>}, {pipeline_mode = #tpu.pipeline_mode<synchronous>, transform_indices = @transform_7, window_bounds = array<i64: 8, 128>}, {pipeline_mode = #tpu.pipeline_mode<synchronous>, transform_indices = @transform_8, window_bounds = array<i64: 1, 1>}, {pipeline_mode = #tpu.pipeline_mode<synchronous>, transform_indices = @transform_9, window_bounds = array<i64: 1, 1>}]} {
    %c0_i32 = arith.constant 0 : i32
    %0 = arith.cmpi eq, %arg0, %c0_i32 : i32
    %1 = arith.extui %0 : i1 to i32
    %c0_i32_0 = arith.constant 0 : i32
    %2 = arith.cmpi ne, %1, %c0_i32_0 : i32
    scf.if %2 {
      %cst_28 = arith.constant 0.000000e+00 : f32
      %71 = vector.broadcast %cst_28 : f32 to vector<8x128xf32>
      %c0_29 = arith.constant 0 : index
      %c0_30 = arith.constant 0 : index
      %72 = vector.load %arg11[%c0_29, %c0_30] : memref<8x128xf32, #tpu.memory_space<vmem>>, vector<8x128xf32>
      tpu.vector_store %arg11[%c0_29, %c0_30], %71 {strides = array<i32>} : memref<8x128xf32, #tpu.memory_space<vmem>>, vector<8x128xf32>,
    } else {
    }
    %c0 = arith.constant 0 : index
    %c0_1 = arith.constant 0 : index
    %3 = vector.load %arg4[%c0, %c0_1] : memref<128x128xf32, #tpu.memory_space<vmem>>, vector<128x128xf32>
    %c0_2 = arith.constant 0 : index
    %c0_3 = arith.constant 0 : index
    %4 = vector.load %arg3[%c0_2, %c0_3] : memref<1x128xf32, #tpu.memory_space<vmem>>, vector<1x128xf32>
    %5 = vector.shape_cast %4 : vector<1x128xf32> to vector<1x128xf32>
    %6 = vector.broadcast %5 : vector<1x128xf32> to vector<8x128xf32>
    %c0_4 = arith.constant 0 : index
    %c0_5 = arith.constant 0 : index
    %7 = vector.load %arg5[%c0_4, %c0_5] : memref<1x128xf32, #tpu.memory_space<vmem>>, vector<1x128xf32>
    %8 = vector.shape_cast %7 : vector<1x128xf32> to vector<1x128xf32>
    %9 = vector.broadcast %8 : vector<1x128xf32> to vector<8x128xf32>
    %c0_6 = arith.constant 0 : index
    %c0_7 = arith.constant 0 : index
    %10 = vector.load %arg11[%c0_6, %c0_7] : memref<8x128xf32, #tpu.memory_space<vmem>>, vector<8x128xf32>
    %c0_8 = arith.constant 0 : index
    %c0_9 = arith.constant 0 : index
    %11 = vector.load %arg1[%c0_8, %c0_9] : memref<8x8xf32, #tpu.memory_space<vmem>>, vector<8x1xf32>
    %12 = vector.broadcast %11 : vector<8x1xf32> to vector<8x128xf32>
    %13 = arith.mulf %12, %6 : vector<8x128xf32>
    %14 = arith.addf %13, %9 : vector<8x128xf32>
    %cst = arith.constant dense<0.000000e+00> : vector<8x128xf32>
    %15 = tpu.matmul %10, %3, %cst {dimension_numbers = #tpu.dot_dimension_numbers<[1], [0], [0], [1], [0, 0, 1, 1], [], []>} : vector<8x128xf32>, vector<128x128xf32>, vector<8x128xf32> -> vector<8x128xf32>
    %16 = arith.addf %15, %14 : vector<8x128xf32>
    %17 = math.tanh %16 : vector<8x128xf32>
    %c0_10 = arith.constant 0 : index
    %c1 = arith.constant 1 : index
    %18 = vector.load %arg1[%c0_10, %c1] : memref<8x8xf32, #tpu.memory_space<vmem>>, vector<8x1xf32>
    %19 = vector.broadcast %18 : vector<8x1xf32> to vector<8x128xf32>
    %20 = arith.mulf %19, %6 : vector<8x128xf32>
    %21 = arith.addf %20, %9 : vector<8x128xf32>
    %cst_11 = arith.constant dense<0.000000e+00> : vector<8x128xf32>
    %22 = tpu.matmul %17, %3, %cst_11 {dimension_numbers = #tpu.dot_dimension_numbers<[1], [0], [0], [1], [0, 0, 1, 1], [], []>} : vector<8x128xf32>, vector<128x128xf32>, vector<8x128xf32> -> vector<8x128xf32>
    %23 = arith.addf %22, %21 : vector<8x128xf32>
    %24 = math.tanh %23 : vector<8x128xf32>
    %c0_12 = arith.constant 0 : index
    %c2 = arith.constant 2 : index
    %25 = vector.load %arg1[%c0_12, %c2] : memref<8x8xf32, #tpu.memory_space<vmem>>, vector<8x1xf32>
    %26 = vector.broadcast %25 : vector<8x1xf32> to vector<8x128xf32>
    %27 = arith.mulf %26, %6 : vector<8x128xf32>
    %28 = arith.addf %27, %9 : vector<8x128xf32>
    %cst_13 = arith.constant dense<0.000000e+00> : vector<8x128xf32>
    %29 = tpu.matmul %24, %3, %cst_13 {dimension_numbers = #tpu.dot_dimension_numbers<[1], [0], [0], [1], [0, 0, 1, 1], [], []>} : vector<8x128xf32>, vector<128x128xf32>, vector<8x128xf32> -> vector<8x128xf32>
    %30 = arith.addf %29, %28 : vector<8x128xf32>
    %31 = math.tanh %30 : vector<8x128xf32>
    %c0_14 = arith.constant 0 : index
    %c3 = arith.constant 3 : index
    %32 = vector.load %arg1[%c0_14, %c3] : memref<8x8xf32, #tpu.memory_space<vmem>>, vector<8x1xf32>
    %33 = vector.broadcast %32 : vector<8x1xf32> to vector<8x128xf32>
    %34 = arith.mulf %33, %6 : vector<8x128xf32>
    %35 = arith.addf %34, %9 : vector<8x128xf32>
    %cst_15 = arith.constant dense<0.000000e+00> : vector<8x128xf32>
    %36 = tpu.matmul %31, %3, %cst_15 {dimension_numbers = #tpu.dot_dimension_numbers<[1], [0], [0], [1], [0, 0, 1, 1], [], []>} : vector<8x128xf32>, vector<128x128xf32>, vector<8x128xf32> -> vector<8x128xf32>
    %37 = arith.addf %36, %35 : vector<8x128xf32>
    %38 = math.tanh %37 : vector<8x128xf32>
    %c0_16 = arith.constant 0 : index
    %c4 = arith.constant 4 : index
    %39 = vector.load %arg1[%c0_16, %c4] : memref<8x8xf32, #tpu.memory_space<vmem>>, vector<8x1xf32>
    %40 = vector.broadcast %39 : vector<8x1xf32> to vector<8x128xf32>
    %41 = arith.mulf %40, %6 : vector<8x128xf32>
    %42 = arith.addf %41, %9 : vector<8x128xf32>
    %cst_17 = arith.constant dense<0.000000e+00> : vector<8x128xf32>
    %43 = tpu.matmul %38, %3, %cst_17 {dimension_numbers = #tpu.dot_dimension_numbers<[1], [0], [0], [1], [0, 0, 1, 1], [], []>} : vector<8x128xf32>, vector<128x128xf32>, vector<8x128xf32> -> vector<8x128xf32>
    %44 = arith.addf %43, %42 : vector<8x128xf32>
    %45 = math.tanh %44 : vector<8x128xf32>
    %c0_18 = arith.constant 0 : index
    %c5 = arith.constant 5 : index
    %46 = vector.load %arg1[%c0_18, %c5] : memref<8x8xf32, #tpu.memory_space<vmem>>, vector<8x1xf32>
    %47 = vector.broadcast %46 : vector<8x1xf32> to vector<8x128xf32>
    %48 = arith.mulf %47, %6 : vector<8x128xf32>
    %49 = arith.addf %48, %9 : vector<8x128xf32>
    %cst_19 = arith.constant dense<0.000000e+00> : vector<8x128xf32>
    %50 = tpu.matmul %45, %3, %cst_19 {dimension_numbers = #tpu.dot_dimension_numbers<[1], [0], [0], [1], [0, 0, 1, 1], [], []>} : vector<8x128xf32>, vector<128x128xf32>, vector<8x128xf32> -> vector<8x128xf32>
    %51 = arith.addf %50, %49 : vector<8x128xf32>
    %52 = math.tanh %51 : vector<8x128xf32>
    %c0_20 = arith.constant 0 : index
    %c6 = arith.constant 6 : index
    %53 = vector.load %arg1[%c0_20, %c6] : memref<8x8xf32, #tpu.memory_space<vmem>>, vector<8x1xf32>
    %54 = vector.broadcast %53 : vector<8x1xf32> to vector<8x128xf32>
    %55 = arith.mulf %54, %6 : vector<8x128xf32>
    %56 = arith.addf %55, %9 : vector<8x128xf32>
    %cst_21 = arith.constant dense<0.000000e+00> : vector<8x128xf32>
    %57 = tpu.matmul %52, %3, %cst_21 {dimension_numbers = #tpu.dot_dimension_numbers<[1], [0], [0], [1], [0, 0, 1, 1], [], []>} : vector<8x128xf32>, vector<128x128xf32>, vector<8x128xf32> -> vector<8x128xf32>
    %58 = arith.addf %57, %56 : vector<8x128xf32>
    %59 = math.tanh %58 : vector<8x128xf32>
    %c0_22 = arith.constant 0 : index
    %c7 = arith.constant 7 : index
    %60 = vector.load %arg1[%c0_22, %c7] : memref<8x8xf32, #tpu.memory_space<vmem>>, vector<8x1xf32>
    %61 = vector.broadcast %60 : vector<8x1xf32> to vector<8x128xf32>
    %62 = arith.mulf %61, %6 : vector<8x128xf32>
    %63 = arith.addf %62, %9 : vector<8x128xf32>
    %cst_23 = arith.constant dense<0.000000e+00> : vector<8x128xf32>
    %64 = tpu.matmul %59, %3, %cst_23 {dimension_numbers = #tpu.dot_dimension_numbers<[1], [0], [0], [1], [0, 0, 1, 1], [], []>} : vector<8x128xf32>, vector<128x128xf32>, vector<8x128xf32> -> vector<8x128xf32>
    %65 = arith.addf %64, %63 : vector<8x128xf32>
    %66 = math.tanh %65 : vector<8x128xf32>
    %c0_24 = arith.constant 0 : index
    %c0_25 = arith.constant 0 : index
    %67 = vector.load %arg11[%c0_24, %c0_25] : memref<8x128xf32, #tpu.memory_space<vmem>>, vector<8x128xf32>
    tpu.vector_store %arg11[%c0_24, %c0_25], %66 {strides = array<i32>} : memref<8x128xf32, #tpu.memory_space<vmem>>, vector<8x128xf32>,
    %c0_i32_26 = arith.constant 0 : i32
    %68 = arith.cmpi eq, %arg0, %c0_i32_26 : i32
    %69 = arith.extui %68 : i1 to i32
    %c0_i32_27 = arith.constant 0 : i32
    %70 = arith.cmpi ne, %69, %c0_i32_27 : i32
    scf.if %70 {
      %c0_28 = arith.constant 0 : index
      %c0_29 = arith.constant 0 : index
      %71 = vector.load %arg11[%c0_28, %c0_29] : memref<8x128xf32, #tpu.memory_space<vmem>>, vector<8x128xf32>
      %c0_30 = arith.constant 0 : index
      %c0_31 = arith.constant 0 : index
      %72 = vector.load %arg6[%c0_30, %c0_31] : memref<128x128xf32, #tpu.memory_space<vmem>>, vector<128x128xf32>
      %cst_32 = arith.constant dense<0.000000e+00> : vector<8x128xf32>
      %73 = tpu.matmul %71, %72, %cst_32 {dimension_numbers = #tpu.dot_dimension_numbers<[1], [0], [0], [1], [0, 0, 1, 1], [], []>} : vector<8x128xf32>, vector<128x128xf32>, vector<8x128xf32> -> vector<8x128xf32>
      %c0_33 = arith.constant 0 : index
      %c0_34 = arith.constant 0 : index
      %74 = vector.load %arg7[%c0_33, %c0_34] : memref<1x128xf32, #tpu.memory_space<vmem>>, vector<1x128xf32>
      %75 = vector.broadcast %74 : vector<1x128xf32> to vector<8x128xf32>
      %76 = arith.addf %73, %75 : vector<8x128xf32>
      %c0_35 = arith.constant 0 : index
      %c0_36 = arith.constant 0 : index
      %77 = vector.load %arg8[%c0_35, %c0_36] : memref<8x128xf32, #tpu.memory_space<vmem>>, vector<8x128xf32>
      tpu.vector_store %arg8[%c0_35, %c0_36], %76 {strides = array<i32>} : memref<8x128xf32, #tpu.memory_space<vmem>>, vector<8x128xf32>,
      %78 = tpu.iota {dimensions = array<i32: 1>} : vector<8x128xi32>
      %c0_37 = arith.constant 0 : index
      %c0_38 = arith.constant 0 : index
      %79 = vector.load %arg2[%c0_37, %c0_38] : memref<8x1xi32, #tpu.memory_space<vmem>>, vector<8x1xi32>
      %c10_i32 = arith.constant 10 : i32
      %80 = vector.broadcast %c10_i32 : i32 to vector<8x128xi32>
      %81 = arith.cmpi slt, %78, %80 : vector<8x128xi32>
      %cst_39 = arith.constant -1.000000e+30 : f32
      %82 = vector.broadcast %cst_39 : f32 to vector<8x128xf32>
      %83 = arith.select %81, %76, %82 : vector<8x128xi1>, vector<8x128xf32>
      %cst_40 = arith.constant dense<0xFF800000> : vector<8xf32>
      %84 = vector.multi_reduction <maximumf>, %83, %cst_40 [1] : vector<8x128xf32> to vector<8xf32>
      %85 = vector.shape_cast %84 : vector<8xf32> to vector<8x1xf32>
      %86 = vector.broadcast %85 : vector<8x1xf32> to vector<8x128xf32>
      %87 = arith.subf %83, %86 : vector<8x128xf32>
      %88 = math.exp %87 : vector<8x128xf32>
      %cst_41 = arith.constant dense<0.000000e+00> : vector<8xf32>
      %89 = vector.multi_reduction <add>, %88, %cst_41 [1] : vector<8x128xf32> to vector<8xf32>
      %90 = vector.shape_cast %89 : vector<8xf32> to vector<8x1xf32>
      %91 = math.log %90 : vector<8x1xf32>
      %92 = arith.addf %85, %91 : vector<8x1xf32>
      %93 = vector.broadcast %79 : vector<8x1xi32> to vector<8x128xi32>
      %94 = arith.cmpi eq, %78, %93 : vector<8x128xi32>
      %cst_42 = arith.constant 0.000000e+00 : f32
      %95 = vector.broadcast %cst_42 : f32 to vector<8x128xf32>
      %96 = arith.select %94, %76, %95 : vector<8x128xi1>, vector<8x128xf32>
      %cst_43 = arith.constant dense<0.000000e+00> : vector<8xf32>
      %97 = vector.multi_reduction <add>, %96, %cst_43 [1] : vector<8x128xf32> to vector<8xf32>
      %98 = vector.shape_cast %97 : vector<8xf32> to vector<8x1xf32>
      %99 = arith.subf %92, %98 : vector<8x1xf32>
      %100 = tpu.iota {dimensions = array<i32: 0>} : vector<8x1xi32>
      %c2_i32 = arith.constant 2 : i32
      %101 = vector.broadcast %c2_i32 : i32 to vector<8x1xi32>
      %102 = arith.cmpi slt, %100, %101 : vector<8x1xi32>
      %cst_44 = arith.constant 0.000000e+00 : f32
      %103 = vector.broadcast %cst_44 : f32 to vector<8x1xf32>
      %104 = arith.select %102, %99, %103 : vector<8x1xi1>, vector<8x1xf32>
      %cst_45 = arith.constant dense<0.000000e+00> : vector<1xf32>
      %105 = vector.multi_reduction <add>, %104, %cst_45 [0] : vector<8x1xf32> to vector<1xf32>
      %106 = vector.shape_cast %105 : vector<1xf32> to vector<1x1xf32>
      %cst_46 = arith.constant 2.000000e+00 : f32
      %107 = vector.broadcast %cst_46 : f32 to vector<1x1xf32>
      %108 = arith.divf %106, %107 : vector<1x1xf32>
      %c0_47 = arith.constant 0 : index
      %c0_48 = arith.constant 0 : index
      %109 = vector.load %arg9[%c0_47, %c0_48] : memref<1x1xf32, #tpu.memory_space<vmem>>, vector<1x1xf32>
      tpu.vector_store %arg9[%c0_47, %c0_48], %108 {strides = array<i32>} : memref<1x1xf32, #tpu.memory_space<vmem>>, vector<1x1xf32>,
      %110 = vector.broadcast %85 : vector<8x1xf32> to vector<8x128xf32>
      %111 = arith.cmpf oeq, %83, %110 : vector<8x128xf32>
      %c128_i32 = arith.constant 128 : i32
      %112 = vector.broadcast %c128_i32 : i32 to vector<8x128xi32>
      %113 = arith.select %111, %78, %112 : vector<8x128xi1>, vector<8x128xi32>
      %cst_49 = arith.constant dense<2147483647> : vector<8xi32>
      %114 = vector.multi_reduction <minsi>, %113, %cst_49 [1] : vector<8x128xi32> to vector<8xi32>
      %115 = vector.shape_cast %114 : vector<8xi32> to vector<8x1xi32>
      %116 = arith.cmpi eq, %115, %79 : vector<8x1xi32>
      %117 = arith.andi %102, %116 : vector<8x1xi1>
      %c1_i32 = arith.constant 1 : i32
      %c0_i32_50 = arith.constant 0 : i32
      %118 = vector.broadcast %c1_i32 : i32 to vector<8x1xi32>
      %119 = vector.broadcast %c0_i32_50 : i32 to vector<8x1xi32>
      %120 = arith.select %117, %118, %119 : vector<8x1xi1>, vector<8x1xi32>
      %cst_51 = arith.constant dense<0> : vector<1xi32>
      %121 = vector.multi_reduction <add>, %120, %cst_51 [0] : vector<8x1xi32> to vector<1xi32>
      %122 = vector.shape_cast %121 : vector<1xi32> to vector<1x1xi32>
      %c0_52 = arith.constant 0 : index
      %c0_53 = arith.constant 0 : index
      %123 = vector.load %arg10[%c0_52, %c0_53] : memref<1x1xi32, #tpu.memory_space<vmem>>, vector<1x1xi32>
      tpu.vector_store %arg10[%c0_52, %c0_53], %122 {strides = array<i32>} : memref<1x1xi32, #tpu.memory_space<vmem>>, vector<1x1xi32>,
    } else {
    }
    return
  }
  func.func @transform_0(%arg0: i32) -> (i32, i32) {
    %c0_i32 = arith.constant 0 : i32
    %c0_i32_0 = arith.constant 0 : i32
    return %c0_i32, %arg0 : i32, i32
  }
  func.func @transform_1(%arg0: i32) -> (i32, i32) {
    %c0_i32 = arith.constant 0 : i32
    %c0_i32_0 = arith.constant 0 : i32
    %c0_i32_1 = arith.constant 0 : i32
    return %c0_i32, %c0_i32_0 : i32, i32
  }
  func.func @transform_2(%arg0: i32) -> (i32, i32) {
    %c0_i32 = arith.constant 0 : i32
    %c0_i32_0 = arith.constant 0 : i32
    %c0_i32_1 = arith.constant 0 : i32
    return %c0_i32, %c0_i32_0 : i32, i32
  }
  func.func @transform_3(%arg0: i32) -> (i32, i32) {
    %c0_i32 = arith.constant 0 : i32
    %c0_i32_0 = arith.constant 0 : i32
    %c0_i32_1 = arith.constant 0 : i32
    return %c0_i32, %c0_i32_0 : i32, i32
  }
  func.func @transform_4(%arg0: i32) -> (i32, i32) {
    %c0_i32 = arith.constant 0 : i32
    %c0_i32_0 = arith.constant 0 : i32
    %c0_i32_1 = arith.constant 0 : i32
    return %c0_i32, %c0_i32_0 : i32, i32
  }
  func.func @transform_5(%arg0: i32) -> (i32, i32) {
    %c0_i32 = arith.constant 0 : i32
    %c0_i32_0 = arith.constant 0 : i32
    %c0_i32_1 = arith.constant 0 : i32
    return %c0_i32, %c0_i32_0 : i32, i32
  }
  func.func @transform_6(%arg0: i32) -> (i32, i32) {
    %c0_i32 = arith.constant 0 : i32
    %c0_i32_0 = arith.constant 0 : i32
    %c0_i32_1 = arith.constant 0 : i32
    return %c0_i32, %c0_i32_0 : i32, i32
  }
  func.func @transform_7(%arg0: i32) -> (i32, i32) {
    %c0_i32 = arith.constant 0 : i32
    %c0_i32_0 = arith.constant 0 : i32
    %c0_i32_1 = arith.constant 0 : i32
    return %c0_i32, %c0_i32_0 : i32, i32
  }
  func.func @transform_8(%arg0: i32) -> (i32, i32) {
    %c0_i32 = arith.constant 0 : i32
    %c0_i32_0 = arith.constant 0 : i32
    %c0_i32_1 = arith.constant 0 : i32
    return %c0_i32, %c0_i32_0 : i32, i32
  }
  func.func @transform_9(%arg0: i32) -> (i32, i32) {
    %c0_i32 = arith.constant 0 : i32
    %c0_i32_0 = arith.constant 0 : i32
    %c0_i32_1 = arith.constant 0 : i32
    return %c0_i32, %c0_i32_0 : i32, i32
  }
}

</mosaic_0001>

<llo_original>
// kernel: tpu_custom_call.1
$region0: #{tpu_custom_call.1}
  #allocation0 [shape = 'u32[]', space=smem, size = 0x4, offset = 0x4, fixed_abs, tag = 'smem constant byte address 0x4 - core index']
  #allocation1 [shape = 'u32[144,128]{1,0:T(1,128)}', space=vmem, size = 0x12000, scoped, tag = 'internal scratch']
  #allocation2 [shape = 'f32[8,128]{1,0:T(8,128)}', space=vmem, size = 0x1000, scoped, tag = 'scratch operand']
  %s0 = inlined_call_operand.vmem [shape: f32[8,8], index: 0, kind: input, shape index: {}]
  %s1 = inlined_call_operand.vmem [shape: s32[8,1], index: 1, kind: input, shape index: {}]
  %s2 = inlined_call_operand.vmem [shape: f32[1,128], index: 2, kind: input, shape index: {}]
  %s3 = inlined_call_operand.hbm [shape: f32[128,128], index: 3, kind: input, shape index: {}]
  %s4 = inlined_call_operand.vmem [shape: f32[1,128], index: 4, kind: input, shape index: {}]
  %s5 = inlined_call_operand.hbm [shape: f32[128,128], index: 5, kind: input, shape index: {}]
  %s6 = inlined_call_operand.vmem [shape: f32[1,128], index: 6, kind: input, shape index: {}]
  %s7 = inlined_call_operand.hbm [shape: f32[8,128], index: 7, kind: output, shape index: {0}]
  %s8 = inlined_call_operand.hbm [shape: f32[1,1], index: 8, kind: output, shape index: {1}]
  %s9 = inlined_call_operand.hbm [shape: s32[1,1], index: 9, kind: output, shape index: {2}]
  %10 = xla_tuple %s7, %s8, %s9
  %s11 = sld [smem:[#allocation0]]
  $region70: #{tpu_custom_call.1} parent=0
    _
  %s13 = ssub.s32 1, %s11
  %s14 = scalar_select 0, %s13, %s11
  $region1: #{tpu_custom_call.1} parent=0
    #allocation3 [shape = 'u8[65536]{0}', space=vmem, size = 0x10000, scoped, tag = 'input window, operand 3, single buffered']
    #allocation4 [shape = 's32[1]{0}', space=sflag, size = 0x4, scoped, tag = 'scoped memory for tpu_custom_call.1']
    #allocation5 [shape = 's32[1]{0}', space=sflag, size = 0x4, scoped, tag = 'scoped memory for tpu_custom_call.1']
    #allocation6 [shape = 'u8[65536]{0}', space=vmem, size = 0x10000, scoped, tag = 'input window, operand 5, single buffered']
    #allocation7 [shape = 's32[1]{0}', space=sflag, size = 0x4, scoped, tag = 'scoped memory for tpu_custom_call.1']
    #allocation8 [shape = 'u8[4096]{0}', space=vmem, size = 0x1000, scoped, tag = 'output window, operand 0, single buffered']
    #allocation9 [shape = 'u8[512]{0}', space=vmem, size = 0x400, scoped, tag = 'output window, operand 1, single buffered']
    #allocation10 [shape = 's32[1]{0}', space=sflag, size = 0x4, scoped, tag = 'scoped memory for tpu_custom_call.1']
    #allocation11 [shape = 'u8[512]{0}', space=vmem, size = 0x400, scoped, tag = 'output window, operand 2, single buffered']
    %15 = vsyncpa [#allocation4], 0
    %16 = vsyncpa [#allocation7], 0
    %17 = vsyncpa [#allocation5], 0
    %18 = vsyncpa [#allocation10], 0
    // Predicated region
    $region2: #{tpu_custom_call.1} parent=1 // pred_check
      _
    $region3: #{tpu_custom_call.1} parent=1 // pred_check_branch
      %20 = sbr.rel (0) target = $region5
    $region4: #{tpu_custom_call.1} parent=1 // pred_region
      _
    $region5: #{tpu_custom_call.1} parent=1 // pred_fallthru
      _
    // Predicated region
    $region6: #{tpu_custom_call.1} parent=1 // pred_check
      _
    $region7: #{tpu_custom_call.1} parent=1 // pred_check_branch
      %22 = sbr.rel (0) target = $region9
    $region8: #{tpu_custom_call.1} parent=1 // pred_region
      _
    $region9: #{tpu_custom_call.1} parent=1 // pred_fallthru
      _
    // Predicated region
    $region10: #{tpu_custom_call.1} parent=1 // pred_check
      _
    $region11: #{tpu_custom_call.1} parent=1 // pred_check_branch
      %24 = sbr.rel (0) target = $region13
    $region12: #{tpu_custom_call.1} parent=1 // pred_region
      _
    $region13: #{tpu_custom_call.1} parent=1 // pred_fallthru
      _
    // Predicated region
    $region14: #{tpu_custom_call.1} parent=1 // pred_check
      _
    $region15: #{tpu_custom_call.1} parent=1 // pred_check_branch
      %26 = sbr.rel (0) target = $region17
    $region16: #{tpu_custom_call.1} parent=1 // pred_region
      %s28 = ssub.s32 2048, 2048
      %29 = vsyncadd [#allocation4], %s28
      %s30 = sshll.u32 [#allocation3], 4
      %s31 = int_to_ptr.vmem [resolvable:$true] %s30
      %36 = dma.hbm_to_vmem [thread:$0]  %s3, 2048, %s31, [#allocation4], 128, 128, 8
    $region17: #{tpu_custom_call.1} parent=1 // pred_fallthru
      _
    // Predicated region
    $region18: #{tpu_custom_call.1} parent=1 // pred_check
      _
    $region19: #{tpu_custom_call.1} parent=1 // pred_check_branch
      %38 = sbr.rel (0) target = $region21
    $region20: #{tpu_custom_call.1} parent=1 // pred_region
      _
    $region21: #{tpu_custom_call.1} parent=1 // pred_fallthru
      _
    // Predicated region
    $region22: #{tpu_custom_call.1} parent=1 // pred_check
      _
    $region23: #{tpu_custom_call.1} parent=1 // pred_check_branch
      %40 = sbr.rel (0) target = $region25
    $region24: #{tpu_custom_call.1} parent=1 // pred_region
      %s42 = ssub.s32 2048, 2048
      %43 = vsyncadd [#allocation7], %s42
      %s44 = sshll.u32 [#allocation6], 4
      %s45 = int_to_ptr.vmem [resolvable:$true] %s44
      %50 = dma.hbm_to_vmem [thread:$0]  %s5, 2048, %s45, [#allocation7], 128, 128, 8
    $region25: #{tpu_custom_call.1} parent=1 // pred_fallthru
      _
    // Predicated region
    $region26: #{tpu_custom_call.1} parent=1 // pred_check
      _
    $region27: #{tpu_custom_call.1} parent=1 // pred_check_branch
      %52 = sbr.rel (0) target = $region29
    $region28: #{tpu_custom_call.1} parent=1 // pred_region
      _
    $region29: #{tpu_custom_call.1} parent=1 // pred_fallthru
      _
    // Predicated region
    $region30: #{tpu_custom_call.1} parent=1 // pred_check
      _
    $region31: #{tpu_custom_call.1} parent=1 // pred_check_branch
      %54 = sbr.rel (0) target = $region33
    $region32: #{tpu_custom_call.1} parent=1 // pred_region
      %55 = dma.done [#allocation4], 2048
    $region33: #{tpu_custom_call.1} parent=1 // pred_fallthru
      _
    // Predicated region
    $region34: #{tpu_custom_call.1} parent=1 // pred_check
      _
    $region35: #{tpu_custom_call.1} parent=1 // pred_check_branch
      %57 = sbr.rel (0) target = $region37
    $region36: #{tpu_custom_call.1} parent=1 // pred_region
      %58 = dma.done [#allocation7], 2048
    $region37: #{tpu_custom_call.1} parent=1 // pred_fallthru
      _
    %p59 = scmp.eq.s32.totalorder 0, 0
    // Predicated region
    $region38: #{tpu_custom_call.1} parent=1 // pred_check
      %p60 = pneg %p59
    $region39: #{tpu_custom_call.1} parent=1 // pred_check_branch
      %62 = sbr.rel (%p60) target = $region41
    $region40: #{tpu_custom_call.1} parent=1 // pred_region
      %63 = vst [vmem:[#allocation2] sm:$0xff] 0.0
    $region41: #{tpu_custom_call.1} parent=1 // pred_fallthru
      _
    %v64 = vld [vmem:[#allocation3] sm:$0xff]
    %v65 = vld [vmem:[#allocation3 + $0x8] sm:$0xff]
    %v66 = vld [vmem:[#allocation3 + $0x10] sm:$0xff]
    %v67 = vld [vmem:[#allocation3 + $0x18] sm:$0xff]
    %v68 = vld [vmem:[#allocation3 + $0x20] sm:$0xff]
    %v69 = vld [vmem:[#allocation3 + $0x28] sm:$0xff]
    %v70 = vld [vmem:[#allocation3 + $0x30] sm:$0xff]
    %v71 = vld [vmem:[#allocation3 + $0x38] sm:$0xff]
    %v72 = vld [vmem:[#allocation3 + $0x40] sm:$0xff]
    %v73 = vld [vmem:[#allocation3 + $0x48] sm:$0xff]
    %v74 = vld [vmem:[#allocation3 + $0x50] sm:$0xff]
    %v75 = vld [vmem:[#allocation3 + $0x58] sm:$0xff]
    %v76 = vld [vmem:[#allocation3 + $0x60] sm:$0xff]
    %v77 = vld [vmem:[#allocation3 + $0x68] sm:$0xff]
    %v78 = vld [vmem:[#allocation3 + $0x70] sm:$0xff]
    %v79 = vld [vmem:[#allocation3 + $0x78] sm:$0xff]
    %v80 = vld [vmem:[%s2] sm:$0x1]
    %v82 = vlaneseq
    %v83 = vshrl.u32 %v82, 7
    %v84 = vsub.s32 0, %v83
    %v85 = vrot.slane %v80, %v84
    %v87 = vld [vmem:[%s4] sm:$0x1]
    %v89 = vlaneseq
    %v90 = vshrl.u32 %v89, 7
    %v91 = vsub.s32 0, %v90
    %v92 = vrot.slane %v87, %v91
    %v94 = vld [vmem:[#allocation2] sm:$0xff]
    %v95 = vld [vmem:[%s0] sm:$0xff]
    %97 = vset.pattern.permute.xlu0 0
    %98 = vperm.xlu0 %97, %v95
    %v99 = vpop.permute.xlu0 %98
    %v101 = vmul.f32 %v99, %v85
    %v102 = vadd.f32 %v101, %v92
    %103 = vmatprep.subr.mxu0 0.0
    %104 = vmatpush1.msra.mxu0 %v79
    %105 = vmatprep.subr.mxu0 0.0
    %106 = vmatpush1.msra.mxu0 %v78
    %107 = vmatprep.subr.mxu0 0.0
    %108 = vmatpush1.msra.mxu0 %v77
    %109 = vmatprep.subr.mxu0 0.0
    %110 = vmatpush1.msra.mxu0 %v76
    %111 = vmatprep.subr.mxu0 0.0
    %112 = vmatpush1.msra.mxu0 %v75
    %113 = vmatprep.subr.mxu0 0.0
    %114 = vmatpush1.msra.mxu0 %v74
    %115 = vmatprep.subr.mxu0 0.0
    %116 = vmatpush1.msra.mxu0 %v73
    %117 = vmatprep.subr.mxu0 0.0
    %118 = vmatpush1.msra.mxu0 %v72
    %119 = vmatprep.subr.mxu0 0.0
    %120 = vmatpush1.msra.mxu0 %v71
    %121 = vmatprep.subr.mxu0 0.0
    %122 = vmatpush1.msra.mxu0 %v70
    %123 = vmatprep.subr.mxu0 0.0
    %124 = vmatpush1.msra.mxu0 %v69
    %125 = vmatprep.subr.mxu0 0.0
    %126 = vmatpush1.msra.mxu0 %v68
    %127 = vmatprep.subr.mxu0 0.0
    %128 = vmatpush1.msra.mxu0 %v67
    %129 = vmatprep.subr.mxu0 0.0
    %130 = vmatpush1.msra.mxu0 %v66
    %131 = vmatprep.subr.mxu0 0.0
    %132 = vmatpush1.msra.mxu0 %v65
    %133 = vmatprep.subr.mxu0 0.0
    %134 = vmatpush1.msra.mxu0 %v64
    %135 = vmatprep.subr.mxu0 0.0
    %136 = vmatpush2.msra.mxu0 0.0
    %137 = vmatprep.subr.mxu0 0.0
    %138 = vmatpush2.msra.mxu0 0.0
    %139 = vmatprep.subr.mxu0 0.0
    %140 = vmatpush2.msra.mxu0 0.0
    %141 = vmatprep.subr.mxu0 0.0
    %142 = vmatpush2.msra.mxu0 0.0
    %143 = vmatprep.subr.mxu0 0.0
    %144 = vmatpush2.msra.mxu0 0.0
    %145 = vmatprep.subr.mxu0 0.0
    %146 = vmatpush2.msra.mxu0 0.0
    %147 = vmatprep.subr.mxu0 0.0
    %148 = vmatpush2.msra.mxu0 0.0
    %149 = vmatprep.subr.mxu0 0.0
    %150 = vmatpush2.msra.mxu0 0.0
    %151 = vmatprep.subr.mxu0 0.0
    %152 = vmatpush2.msra.mxu0 0.0
    %153 = vmatprep.subr.mxu0 0.0
    %154 = vmatpush2.msra.mxu0 0.0
    %155 = vmatprep.subr.mxu0 0.0
    %156 = vmatpush2.msra.mxu0 0.0
    %157 = vmatprep.subr.mxu0 0.0
    %158 = vmatpush2.msra.mxu0 0.0
    %159 = vmatprep.subr.mxu0 0.0
    %160 = vmatpush2.msra.mxu0 0.0
    %161 = vmatprep.subr.mxu0 0.0
    %162 = vmatpush2.msra.mxu0 0.0
    %163 = vmatprep.subr.mxu0 0.0
    %164 = vmatpush2.msra.mxu0 0.0
    %165 = vmatprep.subr.mxu0 0.0
    %166 = vmatpush2.msra.mxu0 0.0
    %167 = vmatprep.mubr.f32.mxu0 0.0
    %168 = vmatmul.mubr.f32.gmra.mxu0 %v94
    %v169 = vpop.f32.mrf.mxu0
    %v170 = vadd.f32 %v102, %v169
    %v171 = vpop.f32.mrf.mxu0
    %172 = vdwg.mxu0
    %v173 = vtanh.pop %v170
    %174 = vset.pattern.permute.xlu0 1
    %175 = vperm.xlu0 %174, %v95
    %v176 = vpop.permute.xlu0 %175
    %v178 = vmul.f32 %v176, %v85
    %v179 = vadd.f32 %v178, %v92
    %180 = vmatprep.subr.mxu0 0.0
    %181 = vmatpush1.msra.mxu0 %v79
    %182 = vmatprep.subr.mxu0 0.0
    %183 = vmatpush1.msra.mxu0 %v78
    %184 = vmatprep.subr.mxu0 0.0
    %185 = vmatpush1.msra.mxu0 %v77
    %186 = vmatprep.subr.mxu0 0.0
    %187 = vmatpush1.msra.mxu0 %v76
    %188 = vmatprep.subr.mxu0 0.0
    %189 = vmatpush1.msra.mxu0 %v75
    %190 = vmatprep.subr.mxu0 0.0
    %191 = vmatpush1.msra.mxu0 %v74
    %192 = vmatprep.subr.mxu0 0.0
    %193 = vmatpush1.msra.mxu0 %v73
    %194 = vmatprep.subr.mxu0 0.0
    %195 = vmatpush1.msra.mxu0 %v72
    %196 = vmatprep.subr.mxu0 0.0
    %197 = vmatpush1.msra.mxu0 %v71
    %198 = vmatprep.subr.mxu0 0.0
    %199 = vmatpush1.msra.mxu0 %v70
    %200 = vmatprep.subr.mxu0 0.0
    %201 = vmatpush1.msra.mxu0 %v69
    %202 = vmatprep.subr.mxu0 0.0
    %203 = vmatpush1.msra.mxu0 %v68
    %204 = vmatprep.subr.mxu0 0.0
    %205 = vmatpush1.msra.mxu0 %v67
    %206 = vmatprep.subr.mxu0 0.0
    %207 = vmatpush1.msra.mxu0 %v66
    %208 = vmatprep.subr.mxu0 0.0
    %209 = vmatpush1.msra.mxu0 %v65
    %210 = vmatprep.subr.mxu0 0.0
    %211 = vmatpush1.msra.mxu0 %v64
    %212 = vmatprep.subr.mxu0 0.0
    %213 = vmatpush2.msra.mxu0 0.0
    %214 = vmatprep.subr.mxu0 0.0
    %215 = vmatpush2.msra.mxu0 0.0
    %216 = vmatprep.subr.mxu0 0.0
    %217 = vmatpush2.msra.mxu0 0.0
    %218 = vmatprep.subr.mxu0 0.0
    %219 = vmatpush2.msra.mxu0 0.0
    %220 = vmatprep.subr.mxu0 0.0
    %221 = vmatpush2.msra.mxu0 0.0
    %222 = vmatprep.subr.mxu0 0.0
    %223 = vmatpush2.msra.mxu0 0.0
    %224 = vmatprep.subr.mxu0 0.0
    %225 = vmatpush2.msra.mxu0 0.0
    %226 = vmatprep.subr.mxu0 0.0
    %227 = vmatpush2.msra.mxu0 0.0
    %228 = vmatprep.subr.mxu0 0.0
    %229 = vmatpush2.msra.mxu0 0.0
    %230 = vmatprep.subr.mxu0 0.0
    %231 = vmatpush2.msra.mxu0 0.0
    %232 = vmatprep.subr.mxu0 0.0
    %233 = vmatpush2.msra.mxu0 0.0
    %234 = vmatprep.subr.mxu0 0.0
    %235 = vmatpush2.msra.mxu0 0.0
    %236 = vmatprep.subr.mxu0 0.0
    %237 = vmatpush2.msra.mxu0 0.0
    %238 = vmatprep.subr.mxu0 0.0
    %239 = vmatpush2.msra.mxu0 0.0
    %240 = vmatprep.subr.mxu0 0.0
    %241 = vmatpush2.msra.mxu0 0.0
    %242 = vmatprep.subr.mxu0 0.0
    %243 = vmatpush2.msra.mxu0 0.0
    %244 = vmatprep.mubr.f32.mxu0 0.0
    %245 = vmatmul.mubr.f32.gmra.mxu0 %v173
    %v246 = vpop.f32.mrf.mxu0
    %v247 = vadd.f32 %v179, %v246
    %v248 = vpop.f32.mrf.mxu0
    %249 = vdwg.mxu0
    %v250 = vtanh.pop %v247
    %251 = vset.pattern.permute.xlu0 2
    %252 = vperm.xlu0 %251, %v95
    %v253 = vpop.permute.xlu0 %252
    %v255 = vmul.f32 %v253, %v85
    %v256 = vadd.f32 %v255, %v92
    %257 = vmatprep.subr.mxu0 0.0
    %258 = vmatpush1.msra.mxu0 %v79
    %259 = vmatprep.subr.mxu0 0.0
    %260 = vmatpush1.msra.mxu0 %v78
    %261 = vmatprep.subr.mxu0 0.0
    %262 = vmatpush1.msra.mxu0 %v77
    %263 = vmatprep.subr.mxu0 0.0
    %264 = vmatpush1.msra.mxu0 %v76
    %265 = vmatprep.subr.mxu0 0.0
    %266 = vmatpush1.msra.mxu0 %v75
    %267 = vmatprep.subr.mxu0 0.0
    %268 = vmatpush1.msra.mxu0 %v74
    %269 = vmatprep.subr.mxu0 0.0
    %270 = vmatpush1.msra.mxu0 %v73
    %271 = vmatprep.subr.mxu0 0.0
    %272 = vmatpush1.msra.mxu0 %v72
    %273 = vmatprep.subr.mxu0 0.0
    %274 = vmatpush1.msra.mxu0 %v71
    %275 = vmatprep.subr.mxu0 0.0
    %276 = vmatpush1.msra.mxu0 %v70
    %277 = vmatprep.subr.mxu0 0.0
    %278 = vmatpush1.msra.mxu0 %v69
    %279 = vmatprep.subr.mxu0 0.0
    %280 = vmatpush1.msra.mxu0 %v68
    %281 = vmatprep.subr.mxu0 0.0
    %282 = vmatpush1.msra.mxu0 %v67
    %283 = vmatprep.subr.mxu0 0.0
    %284 = vmatpush1.msra.mxu0 %v66
    %285 = vmatprep.subr.mxu0 0.0
    %286 = vmatpush1.msra.mxu0 %v65
    %287 = vmatprep.subr.mxu0 0.0
    %288 = vmatpush1.msra.mxu0 %v64
    %289 = vmatprep.subr.mxu0 0.0
    %290 = vmatpush2.msra.mxu0 0.0
    %291 = vmatprep.subr.mxu0 0.0
    %292 = vmatpush2.msra.mxu0 0.0
    %293 = vmatprep.subr.mxu0 0.0
    %294 = vmatpush2.msra.mxu0 0.0
    %295 = vmatprep.subr.mxu0 0.0
    %296 = vmatpush2.msra.mxu0 0.0
    %297 = vmatprep.subr.mxu0 0.0
    %298 = vmatpush2.msra.mxu0 0.0
    %299 = vmatprep.subr.mxu0 0.0
    %300 = vmatpush2.msra.mxu0 0.0
    %301 = vmatprep.subr.mxu0 0.0
    %302 = vmatpush2.msra.mxu0 0.0
    %303 = vmatprep.subr.mxu0 0.0
    %304 = vmatpush2.msra.mxu0 0.0
    %305 = vmatprep.subr.mxu0 0.0
    %306 = vmatpush2.msra.mxu0 0.0
    %307 = vmatprep.subr.mxu0 0.0
    %308 = vmatpush2.msra.mxu0 0.0
    %309 = vmatprep.subr.mxu0 0.0
    %310 = vmatpush2.msra.mxu0 0.0
    %311 = vmatprep.subr.mxu0 0.0
    %312 = vmatpush2.msra.mxu0 0.0
    %313 = vmatprep.subr.mxu0 0.0
    %314 = vmatpush2.msra.mxu0 0.0
    %315 = vmatprep.subr.mxu0 0.0
    %316 = vmatpush2.msra.mxu0 0.0
    %317 = vmatprep.subr.mxu0 0.0
    %318 = vmatpush2.msra.mxu0 0.0
    %319 = vmatprep.subr.mxu0 0.0
    %320 = vmatpush2.msra.mxu0 0.0
    %321 = vmatprep.mubr.f32.mxu0 0.0
    %322 = vmatmul.mubr.f32.gmra.mxu0 %v250
    %v323 = vpop.f32.mrf.mxu0
    %v324 = vadd.f32 %v256, %v323
    %v325 = vpop.f32.mrf.mxu0
    %326 = vdwg.mxu0
    %v327 = vtanh.pop %v324
    %328 = vset.pattern.permute.xlu0 3
    %329 = vperm.xlu0 %328, %v95
    %v330 = vpop.permute.xlu0 %329
    %v332 = vmul.f32 %v330, %v85
    %v333 = vadd.f32 %v332, %v92
    %334 = vmatprep.subr.mxu0 0.0
    %335 = vmatpush1.msra.mxu0 %v79
    %336 = vmatprep.subr.mxu0 0.0
    %337 = vmatpush1.msra.mxu0 %v78
    %338 = vmatprep.subr.mxu0 0.0
    %339 = vmatpush1.msra.mxu0 %v77
    %340 = vmatprep.subr.mxu0 0.0
    %341 = vmatpush1.msra.mxu0 %v76
    %342 = vmatprep.subr.mxu0 0.0
    %343 = vmatpush1.msra.mxu0 %v75
    %344 = vmatprep.subr.mxu0 0.0
    %345 = vmatpush1.msra.mxu0 %v74
    %346 = vmatprep.subr.mxu0 0.0
    %347 = vmatpush1.msra.mxu0 %v73
    %348 = vmatprep.subr.mxu0 0.0
    %349 = vmatpush1.msra.mxu0 %v72
    %350 = vmatprep.subr.mxu0 0.0
    %351 = vmatpush1.msra.mxu0 %v71
    %352 = vmatprep.subr.mxu0 0.0
    %353 = vmatpush1.msra.mxu0 %v70
    %354 = vmatprep.subr.mxu0 0.0
    %355 = vmatpush1.msra.mxu0 %v69
    %356 = vmatprep.subr.mxu0 0.0
    %357 = vmatpush1.msra.mxu0 %v68
    %358 = vmatprep.subr.mxu0 0.0
    %359 = vmatpush1.msra.mxu0 %v67
    %360 = vmatprep.subr.mxu0 0.0
    %361 = vmatpush1.msra.mxu0 %v66
    %362 = vmatprep.subr.mxu0 0.0
    %363 = vmatpush1.msra.mxu0 %v65
    %364 = vmatprep.subr.mxu0 0.0
    %365 = vmatpush1.msra.mxu0 %v64
    %366 = vmatprep.subr.mxu0 0.0
    %367 = vmatpush2.msra.mxu0 0.0
    %368 = vmatprep.subr.mxu0 0.0
    %369 = vmatpush2.msra.mxu0 0.0
    %370 = vmatprep.subr.mxu0 0.0
    %371 = vmatpush2.msra.mxu0 0.0
    %372 = vmatprep.subr.mxu0 0.0
    %373 = vmatpush2.msra.mxu0 0.0
    %374 = vmatprep.subr.mxu0 0.0
    %375 = vmatpush2.msra.mxu0 0.0
    %376 = vmatprep.subr.mxu0 0.0
    %377 = vmatpush2.msra.mxu0 0.0
    %378 = vmatprep.subr.mxu0 0.0
    %379 = vmatpush2.msra.mxu0 0.0
    %380 = vmatprep.subr.mxu0 0.0
    %381 = vmatpush2.msra.mxu0 0.0
    %382 = vmatprep.subr.mxu0 0.0
    %383 = vmatpush2.msra.mxu0 0.0
    %384 = vmatprep.subr.mxu0 0.0
    %385 = vmatpush2.msra.mxu0 0.0
    %386 = vmatprep.subr.mxu0 0.0
    %387 = vmatpush2.msra.mxu0 0.0
    %388 = vmatprep.subr.mxu0 0.0
    %389 = vmatpush2.msra.mxu0 0.0
    %390 = vmatprep.subr.mxu0 0.0
    %391 = vmatpush2.msra.mxu0 0.0
    %392 = vmatprep.subr.mxu0 0.0
    %393 = vmatpush2.msra.mxu0 0.0
    %394 = vmatprep.subr.mxu0 0.0
    %395 = vmatpush2.msra.mxu0 0.0
    %396 = vmatprep.subr.mxu0 0.0
    %397 = vmatpush2.msra.mxu0 0.0
    %398 = vmatprep.mubr.f32.mxu0 0.0
    %399 = vmatmul.mubr.f32.gmra.mxu0 %v327
    %v400 = vpop.f32.mrf.mxu0
    %v401 = vadd.f32 %v333, %v400
    %v402 = vpop.f32.mrf.mxu0
    %403 = vdwg.mxu0
    %v404 = vtanh.pop %v401
    %405 = vset.pattern.permute.xlu0 4
    %406 = vperm.xlu0 %405, %v95
    %v407 = vpop.permute.xlu0 %406
    %v409 = vmul.f32 %v407, %v85
    %v410 = vadd.f32 %v409, %v92
    %411 = vmatprep.subr.mxu0 0.0
    %412 = vmatpush1.msra.mxu0 %v79
    %413 = vmatprep.subr.mxu0 0.0
    %414 = vmatpush1.msra.mxu0 %v78
    %415 = vmatprep.subr.mxu0 0.0
    %416 = vmatpush1.msra.mxu0 %v77
    %417 = vmatprep.subr.mxu0 0.0
    %418 = vmatpush1.msra.mxu0 %v76
    %419 = vmatprep.subr.mxu0 0.0
    %420 = vmatpush1.msra.mxu0 %v75
    %421 = vmatprep.subr.mxu0 0.0
    %422 = vmatpush1.msra.mxu0 %v74
    %423 = vmatprep.subr.mxu0 0.0
    %424 = vmatpush1.msra.mxu0 %v73
    %425 = vmatprep.subr.mxu0 0.0
    %426 = vmatpush1.msra.mxu0 %v72
    %427 = vmatprep.subr.mxu0 0.0
    %428 = vmatpush1.msra.mxu0 %v71
    %429 = vmatprep.subr.mxu0 0.0
    %430 = vmatpush1.msra.mxu0 %v70
    %431 = vmatprep.subr.mxu0 0.0
    %432 = vmatpush1.msra.mxu0 %v69
    %433 = vmatprep.subr.mxu0 0.0
    %434 = vmatpush1.msra.mxu0 %v68
    %435 = vmatprep.subr.mxu0 0.0
    %436 = vmatpush1.msra.mxu0 %v67
    %437 = vmatprep.subr.mxu0 0.0
    %438 = vmatpush1.msra.mxu0 %v66
    %439 = vmatprep.subr.mxu0 0.0
    %440 = vmatpush1.msra.mxu0 %v65
    %441 = vmatprep.subr.mxu0 0.0
    %442 = vmatpush1.msra.mxu0 %v64
    %443 = vmatprep.subr.mxu0 0.0
    %444 = vmatpush2.msra.mxu0 0.0
    %445 = vmatprep.subr.mxu0 0.0
    %446 = vmatpush2.msra.mxu0 0.0
    %447 = vmatprep.subr.mxu0 0.0
    %448 = vmatpush2.msra.mxu0 0.0
    %449 = vmatprep.subr.mxu0 0.0
    %450 = vmatpush2.msra.mxu0 0.0
    %451 = vmatprep.subr.mxu0 0.0
    %452 = vmatpush2.msra.mxu0 0.0
    %453 = vmatprep.subr.mxu0 0.0
    %454 = vmatpush2.msra.mxu0 0.0
    %455 = vmatprep.subr.mxu0 0.0
    %456 = vmatpush2.msra.mxu0 0.0
    %457 = vmatprep.subr.mxu0 0.0
    %458 = vmatpush2.msra.mxu0 0.0
    %459 = vmatprep.subr.mxu0 0.0
    %460 = vmatpush2.msra.mxu0 0.0
    %461 = vmatprep.subr.mxu0 0.0
    %462 = vmatpush2.msra.mxu0 0.0
    %463 = vmatprep.subr.mxu0 0.0
    %464 = vmatpush2.msra.mxu0 0.0
    %465 = vmatprep.subr.mxu0 0.0
    %466 = vmatpush2.msra.mxu0 0.0
    %467 = vmatprep.subr.mxu0 0.0
    %468 = vmatpush2.msra.mxu0 0.0
    %469 = vmatprep.subr.mxu0 0.0
    %470 = vmatpush2.msra.mxu0 0.0
    %471 = vmatprep.subr.mxu0 0.0
    %472 = vmatpush2.msra.mxu0 0.0
    %473 = vmatprep.subr.mxu0 0.0
    %474 = vmatpush2.msra.mxu0 0.0
    %475 = vmatprep.mubr.f32.mxu0 0.0
    %476 = vmatmul.mubr.f32.gmra.mxu0 %v404
    %v477 = vpop.f32.mrf.mxu0
    %v478 = vadd.f32 %v410, %v477
    %v479 = vpop.f32.mrf.mxu0
    %480 = vdwg.mxu0
    %v481 = vtanh.pop %v478
    %482 = vset.pattern.permute.xlu0 5
    %483 = vperm.xlu0 %482, %v95
    %v484 = vpop.permute.xlu0 %483
    %v486 = vmul.f32 %v484, %v85
    %v487 = vadd.f32 %v486, %v92
    %488 = vmatprep.subr.mxu0 0.0
    %489 = vmatpush1.msra.mxu0 %v79
    %490 = vmatprep.subr.mxu0 0.0
    %491 = vmatpush1.msra.mxu0 %v78
    %492 = vmatprep.subr.mxu0 0.0
    %493 = vmatpush1.msra.mxu0 %v77
    %494 = vmatprep.subr.mxu0 0.0
    %495 = vmatpush1.msra.mxu0 %v76
    %496 = vmatprep.subr.mxu0 0.0
    %497 = vmatpush1.msra.mxu0 %v75
    %498 = vmatprep.subr.mxu0 0.0
    %499 = vmatpush1.msra.mxu0 %v74
    %500 = vmatprep.subr.mxu0 0.0
    %501 = vmatpush1.msra.mxu0 %v73
    %502 = vmatprep.subr.mxu0 0.0
    %503 = vmatpush1.msra.mxu0 %v72
    %504 = vmatprep.subr.mxu0 0.0
    %505 = vmatpush1.msra.mxu0 %v71
    %506 = vmatprep.subr.mxu0 0.0
    %507 = vmatpush1.msra.mxu0 %v70
    %508 = vmatprep.subr.mxu0 0.0
    %509 = vmatpush1.msra.mxu0 %v69
    %510 = vmatprep.subr.mxu0 0.0
    %511 = vmatpush1.msra.mxu0 %v68
    %512 = vmatprep.subr.mxu0 0.0
    %513 = vmatpush1.msra.mxu0 %v67
    %514 = vmatprep.subr.mxu0 0.0
    %515 = vmatpush1.msra.mxu0 %v66
    %516 = vmatprep.subr.mxu0 0.0
    %517 = vmatpush1.msra.mxu0 %v65
    %518 = vmatprep.subr.mxu0 0.0
    %519 = vmatpush1.msra.mxu0 %v64
    %520 = vmatprep.subr.mxu0 0.0
    %521 = vmatpush2.msra.mxu0 0.0
    %522 = vmatprep.subr.mxu0 0.0
    %523 = vmatpush2.msra.mxu0 0.0
    %524 = vmatprep.subr.mxu0 0.0
    %525 = vmatpush2.msra.mxu0 0.0
    %526 = vmatprep.subr.mxu0 0.0
    %527 = vmatpush2.msra.mxu0 0.0
    %528 = vmatprep.subr.mxu0 0.0
    %529 = vmatpush2.msra.mxu0 0.0
    %530 = vmatprep.subr.mxu0 0.0
    %531 = vmatpush2.msra.mxu0 0.0
    %532 = vmatprep.subr.mxu0 0.0
    %533 = vmatpush2.msra.mxu0 0.0
    %534 = vmatprep.subr.mxu0 0.0
    %535 = vmatpush2.msra.mxu0 0.0
    %536 = vmatprep.subr.mxu0 0.0
    %537 = vmatpush2.msra.mxu0 0.0
    %538 = vmatprep.subr.mxu0 0.0
    %539 = vmatpush2.msra.mxu0 0.0
    %540 = vmatprep.subr.mxu0 0.0
    %541 = vmatpush2.msra.mxu0 0.0
    %542 = vmatprep.subr.mxu0 0.0
    %543 = vmatpush2.msra.mxu0 0.0
    %544 = vmatprep.subr.mxu0 0.0
    %545 = vmatpush2.msra.mxu0 0.0
    %546 = vmatprep.subr.mxu0 0.0
    %547 = vmatpush2.msra.mxu0 0.0
    %548 = vmatprep.subr.mxu0 0.0
    %549 = vmatpush2.msra.mxu0 0.0
    %550 = vmatprep.subr.mxu0 0.0
    %551 = vmatpush2.msra.mxu0 0.0
    %552 = vmatprep.mubr.f32.mxu0 0.0
    %553 = vmatmul.mubr.f32.gmra.mxu0 %v481
    %v554 = vpop.f32.mrf.mxu0
    %v555 = vadd.f32 %v487, %v554
    %v556 = vpop.f32.mrf.mxu0
    %557 = vdwg.mxu0
    %v558 = vtanh.pop %v555
    %559 = vset.pattern.permute.xlu0 6
    %560 = vperm.xlu0 %559, %v95
    %v561 = vpop.permute.xlu0 %560
    %v563 = vmul.f32 %v561, %v85
    %v564 = vadd.f32 %v563, %v92
    %565 = vmatprep.subr.mxu0 0.0
    %566 = vmatpush1.msra.mxu0 %v79
    %567 = vmatprep.subr.mxu0 0.0
    %568 = vmatpush1.msra.mxu0 %v78
    %569 = vmatprep.subr.mxu0 0.0
    %570 = vmatpush1.msra.mxu0 %v77
    %571 = vmatprep.subr.mxu0 0.0
    %572 = vmatpush1.msra.mxu0 %v76
    %573 = vmatprep.subr.mxu0 0.0
    %574 = vmatpush1.msra.mxu0 %v75
    %575 = vmatprep.subr.mxu0 0.0
    %576 = vmatpush1.msra.mxu0 %v74
    %577 = vmatprep.subr.mxu0 0.0
    %578 = vmatpush1.msra.mxu0 %v73
    %579 = vmatprep.subr.mxu0 0.0
    %580 = vmatpush1.msra.mxu0 %v72
    %581 = vmatprep.subr.mxu0 0.0
    %582 = vmatpush1.msra.mxu0 %v71
    %583 = vmatprep.subr.mxu0 0.0
    %584 = vmatpush1.msra.mxu0 %v70
    %585 = vmatprep.subr.mxu0 0.0
    %586 = vmatpush1.msra.mxu0 %v69
    %587 = vmatprep.subr.mxu0 0.0
    %588 = vmatpush1.msra.mxu0 %v68
    %589 = vmatprep.subr.mxu0 0.0
    %590 = vmatpush1.msra.mxu0 %v67
    %591 = vmatprep.subr.mxu0 0.0
    %592 = vmatpush1.msra.mxu0 %v66
    %593 = vmatprep.subr.mxu0 0.0
    %594 = vmatpush1.msra.mxu0 %v65
    %595 = vmatprep.subr.mxu0 0.0
    %596 = vmatpush1.msra.mxu0 %v64
    %597 = vmatprep.subr.mxu0 0.0
    %598 = vmatpush2.msra.mxu0 0.0
    %599 = vmatprep.subr.mxu0 0.0
    %600 = vmatpush2.msra.mxu0 0.0
    %601 = vmatprep.subr.mxu0 0.0
    %602 = vmatpush2.msra.mxu0 0.0
    %603 = vmatprep.subr.mxu0 0.0
    %604 = vmatpush2.msra.mxu0 0.0
    %605 = vmatprep.subr.mxu0 0.0
    %606 = vmatpush2.msra.mxu0 0.0
    %607 = vmatprep.subr.mxu0 0.0
    %608 = vmatpush2.msra.mxu0 0.0
    %609 = vmatprep.subr.mxu0 0.0
    %610 = vmatpush2.msra.mxu0 0.0
    %611 = vmatprep.subr.mxu0 0.0
    %612 = vmatpush2.msra.mxu0 0.0
    %613 = vmatprep.subr.mxu0 0.0
    %614 = vmatpush2.msra.mxu0 0.0
    %615 = vmatprep.subr.mxu0 0.0
    %616 = vmatpush2.msra.mxu0 0.0
    %617 = vmatprep.subr.mxu0 0.0
    %618 = vmatpush2.msra.mxu0 0.0
    %619 = vmatprep.subr.mxu0 0.0
    %620 = vmatpush2.msra.mxu0 0.0
    %621 = vmatprep.subr.mxu0 0.0
    %622 = vmatpush2.msra.mxu0 0.0
    %623 = vmatprep.subr.mxu0 0.0
    %624 = vmatpush2.msra.mxu0 0.0
    %625 = vmatprep.subr.mxu0 0.0
    %626 = vmatpush2.msra.mxu0 0.0
    %627 = vmatprep.subr.mxu0 0.0
    %628 = vmatpush2.msra.mxu0 0.0
    %629 = vmatprep.mubr.f32.mxu0 0.0
    %630 = vmatmul.mubr.f32.gmra.mxu0 %v558
    %v631 = vpop.f32.mrf.mxu0
    %v632 = vadd.f32 %v564, %v631
    %v633 = vpop.f32.mrf.mxu0
    %634 = vdwg.mxu0
    %v635 = vtanh.pop %v632
    %636 = vset.pattern.permute.xlu0 7
    %637 = vperm.xlu0 %636, %v95
    %v638 = vpop.permute.xlu0 %637
    %v640 = vmul.f32 %v638, %v85
    %v641 = vadd.f32 %v640, %v92
    %642 = vmatprep.subr.mxu0 0.0
    %643 = vmatpush1.msra.mxu0 %v79
    %644 = vmatprep.subr.mxu0 0.0
    %645 = vmatpush1.msra.mxu0 %v78
    %646 = vmatprep.subr.mxu0 0.0
    %647 = vmatpush1.msra.mxu0 %v77
    %648 = vmatprep.subr.mxu0 0.0
    %649 = vmatpush1.msra.mxu0 %v76
    %650 = vmatprep.subr.mxu0 0.0
    %651 = vmatpush1.msra.mxu0 %v75
    %652 = vmatprep.subr.mxu0 0.0
    %653 = vmatpush1.msra.mxu0 %v74
    %654 = vmatprep.subr.mxu0 0.0
    %655 = vmatpush1.msra.mxu0 %v73
    %656 = vmatprep.subr.mxu0 0.0
    %657 = vmatpush1.msra.mxu0 %v72
    %658 = vmatprep.subr.mxu0 0.0
    %659 = vmatpush1.msra.mxu0 %v71
    %660 = vmatprep.subr.mxu0 0.0
    %661 = vmatpush1.msra.mxu0 %v70
    %662 = vmatprep.subr.mxu0 0.0
    %663 = vmatpush1.msra.mxu0 %v69
    %664 = vmatprep.subr.mxu0 0.0
    %665 = vmatpush1.msra.mxu0 %v68
    %666 = vmatprep.subr.mxu0 0.0
    %667 = vmatpush1.msra.mxu0 %v67
    %668 = vmatprep.subr.mxu0 0.0
    %669 = vmatpush1.msra.mxu0 %v66
    %670 = vmatprep.subr.mxu0 0.0
    %671 = vmatpush1.msra.mxu0 %v65
    %672 = vmatprep.subr.mxu0 0.0
    %673 = vmatpush1.msra.mxu0 %v64
    %674 = vmatprep.subr.mxu0 0.0
    %675 = vmatpush2.msra.mxu0 0.0
    %676 = vmatprep.subr.mxu0 0.0
    %677 = vmatpush2.msra.mxu0 0.0
    %678 = vmatprep.subr.mxu0 0.0
    %679 = vmatpush2.msra.mxu0 0.0
    %680 = vmatprep.subr.mxu0 0.0
    %681 = vmatpush2.msra.mxu0 0.0
    %682 = vmatprep.subr.mxu0 0.0
    %683 = vmatpush2.msra.mxu0 0.0
    %684 = vmatprep.subr.mxu0 0.0
    %685 = vmatpush2.msra.mxu0 0.0
    %686 = vmatprep.subr.mxu0 0.0
    %687 = vmatpush2.msra.mxu0 0.0
    %688 = vmatprep.subr.mxu0 0.0
    %689 = vmatpush2.msra.mxu0 0.0
    %690 = vmatprep.subr.mxu0 0.0
    %691 = vmatpush2.msra.mxu0 0.0
    %692 = vmatprep.subr.mxu0 0.0
    %693 = vmatpush2.msra.mxu0 0.0
    %694 = vmatprep.subr.mxu0 0.0
    %695 = vmatpush2.msra.mxu0 0.0
    %696 = vmatprep.subr.mxu0 0.0
    %697 = vmatpush2.msra.mxu0 0.0
    %698 = vmatprep.subr.mxu0 0.0
    %699 = vmatpush2.msra.mxu0 0.0
    %700 = vmatprep.subr.mxu0 0.0
    %701 = vmatpush2.msra.mxu0 0.0
    %702 = vmatprep.subr.mxu0 0.0
    %703 = vmatpush2.msra.mxu0 0.0
    %704 = vmatprep.subr.mxu0 0.0
    %705 = vmatpush2.msra.mxu0 0.0
    %706 = vmatprep.mubr.f32.mxu0 0.0
    %707 = vmatmul.mubr.f32.gmra.mxu0 %v635
    %v708 = vpop.f32.mrf.mxu0
    %v709 = vadd.f32 %v641, %v708
    %v710 = vpop.f32.mrf.mxu0
    %711 = vdwg.mxu0
    %v712 = vtanh.pop %v709
    %713 = vst [vmem:[#allocation2] sm:$0xff] %v712
    // Predicated region
    $region42: #{tpu_custom_call.1} parent=1 // pred_check
      %p714 = pneg %p59
    $region43: #{tpu_custom_call.1} parent=1 // pred_check_branch
      %716 = sbr.rel (%p714) target = $region45
    $region44: #{tpu_custom_call.1} parent=1 // pred_region
      %v717 = vld [vmem:[#allocation2] sm:$0xff]
      %v718 = vld [vmem:[#allocation6] sm:$0xff]
      %v719 = vld [vmem:[#allocation6 + $0x8] sm:$0xff]
      %v720 = vld [vmem:[#allocation6 + $0x10] sm:$0xff]
      %v721 = vld [vmem:[#allocation6 + $0x18] sm:$0xff]
      %v722 = vld [vmem:[#allocation6 + $0x20] sm:$0xff]
      %v723 = vld [vmem:[#allocation6 + $0x28] sm:$0xff]
      %v724 = vld [vmem:[#allocation6 + $0x30] sm:$0xff]
      %v725 = vld [vmem:[#allocation6 + $0x38] sm:$0xff]
      %v726 = vld [vmem:[#allocation6 + $0x40] sm:$0xff]
      %v727 = vld [vmem:[#allocation6 + $0x48] sm:$0xff]
      %v728 = vld [vmem:[#allocation6 + $0x50] sm:$0xff]
      %v729 = vld [vmem:[#allocation6 + $0x58] sm:$0xff]
      %v730 = vld [vmem:[#allocation6 + $0x60] sm:$0xff]
      %v731 = vld [vmem:[#allocation6 + $0x68] sm:$0xff]
      %v732 = vld [vmem:[#allocation6 + $0x70] sm:$0xff]
      %v733 = vld [vmem:[#allocation6 + $0x78] sm:$0xff]
      %v734 = vld [vmem:[%s6] sm:$0x1]
      %v736 = vlaneseq
      %v737 = vshrl.u32 %v736, 7
      %v738 = vsub.s32 0, %v737
      %v739 = vrot.slane %v734, %v738
      %741 = vmatprep.subr.mxu0 0.0
      %742 = vmatpush1.msra.mxu0 %v733
      %743 = vmatprep.subr.mxu0 0.0
      %744 = vmatpush1.msra.mxu0 %v732
      %745 = vmatprep.subr.mxu0 0.0
      %746 = vmatpush1.msra.mxu0 %v731
      %747 = vmatprep.subr.mxu0 0.0
      %748 = vmatpush1.msra.mxu0 %v730
      %749 = vmatprep.subr.mxu0 0.0
      %750 = vmatpush1.msra.mxu0 %v729
      %751 = vmatprep.subr.mxu0 0.0
      %752 = vmatpush1.msra.mxu0 %v728
      %753 = vmatprep.subr.mxu0 0.0
      %754 = vmatpush1.msra.mxu0 %v727
      %755 = vmatprep.subr.mxu0 0.0
      %756 = vmatpush1.msra.mxu0 %v726
      %757 = vmatprep.subr.mxu0 0.0
      %758 = vmatpush1.msra.mxu0 %v725
      %759 = vmatprep.subr.mxu0 0.0
      %760 = vmatpush1.msra.mxu0 %v724
      %761 = vmatprep.subr.mxu0 0.0
      %762 = vmatpush1.msra.mxu0 %v723
      %763 = vmatprep.subr.mxu0 0.0
      %764 = vmatpush1.msra.mxu0 %v722
      %765 = vmatprep.subr.mxu0 0.0
      %766 = vmatpush1.msra.mxu0 %v721
      %767 = vmatprep.subr.mxu0 0.0
      %768 = vmatpush1.msra.mxu0 %v720
      %769 = vmatprep.subr.mxu0 0.0
      %770 = vmatpush1.msra.mxu0 %v719
      %771 = vmatprep.subr.mxu0 0.0
      %772 = vmatpush1.msra.mxu0 %v718
      %773 = vmatprep.subr.mxu0 0.0
      %774 = vmatpush2.msra.mxu0 0.0
      %775 = vmatprep.subr.mxu0 0.0
      %776 = vmatpush2.msra.mxu0 0.0
      %777 = vmatprep.subr.mxu0 0.0
      %778 = vmatpush2.msra.mxu0 0.0
      %779 = vmatprep.subr.mxu0 0.0
      %780 = vmatpush2.msra.mxu0 0.0
      %781 = vmatprep.subr.mxu0 0.0
      %782 = vmatpush2.msra.mxu0 0.0
      %783 = vmatprep.subr.mxu0 0.0
      %784 = vmatpush2.msra.mxu0 0.0
      %785 = vmatprep.subr.mxu0 0.0
      %786 = vmatpush2.msra.mxu0 0.0
      %787 = vmatprep.subr.mxu0 0.0
      %788 = vmatpush2.msra.mxu0 0.0
      %789 = vmatprep.subr.mxu0 0.0
      %790 = vmatpush2.msra.mxu0 0.0
      %791 = vmatprep.subr.mxu0 0.0
      %792 = vmatpush2.msra.mxu0 0.0
      %793 = vmatprep.subr.mxu0 0.0
      %794 = vmatpush2.msra.mxu0 0.0
      %795 = vmatprep.subr.mxu0 0.0
      %796 = vmatpush2.msra.mxu0 0.0
      %797 = vmatprep.subr.mxu0 0.0
      %798 = vmatpush2.msra.mxu0 0.0
      %799 = vmatprep.subr.mxu0 0.0
      %800 = vmatpush2.msra.mxu0 0.0
      %801 = vmatprep.subr.mxu0 0.0
      %802 = vmatpush2.msra.mxu0 0.0
      %803 = vmatprep.subr.mxu0 0.0
      %804 = vmatpush2.msra.mxu0 0.0
      %805 = vmatprep.mubr.f32.mxu0 0.0
      %806 = vmatmul.mubr.f32.gmra.mxu0 %v717
      %v807 = vpop.f32.mrf.mxu0
      %v808 = vadd.f32 %v739, %v807
      %v809 = vpop.f32.mrf.mxu0
      %810 = vdwg.mxu0
      %811 = vst [vmem:[#allocation8] sm:$0xff] %v808
      %v812 = vlaneseq
      %v813 = vand.u32 %v812, 127
      %v814 = vld [vmem:[%s1] sm:$0xff]
      %vm815 = vcmp.lt.s32.totalorder %v813, 10
      %v816 = vsel %vm815, %v808, -1e+30
      %817 = vmax.xlane.f32.xlu0 %v816
      %v818 = vpop.xlane.xlu0 %817
      %v819 = vsub.f32 %v816, %v818
      %v820 = vmul.f32 %v819, 1.442695
      %v821 = vpow.pop %v820
      %822 = vadd.xlane.f32.xlu0 %v821
      %v823 = vpop.xlane.xlu0 %822
      %v824 = vlog2.pop %v823
      %v825 = vmul.f32 %v824, 0.6931472
      %v826 = vadd.f32 %v818, %v825
      %827 = vset.pattern.permute.xlu0 0
      %828 = vperm.xlu0 %827, %v814
      %v829 = vpop.permute.xlu0 %828
      %vm830 = vcmp.eq.s32.totalorder %v813, %v829
      %v831 = vsel %vm830, %v808, 0.0
      %832 = vadd.xlane.f32.xlu0 %v831
      %v833 = vpop.xlane.xlu0 %832
      %v834 = vsub.f32 %v826, %v833
      %v835 = vlaneseq
      %v836 = vshrl.u32 %v835, 7
      %vm837 = vcmp.lt.s32.totalorder %v836, 2
      %v838 = vsel %vm837, %v834, 0.0
      %v839 = vrot.slane %v838, 4
      %v840 = vadd.f32 %v838, %v839
      %v841 = vrot.slane %v840, 2
      %v842 = vadd.f32 %v840, %v841
      %v843 = vrot.slane %v842, 1
      %v844 = vadd.f32 %v842, %v843
      %v845 = vrcp.pop 2.0
      %v846 = vmul.f32 %v844, %v845
      %vm847 = vcmask 0
      %848 = vst.msk [vmem:[#allocation9] sm:$0x1] %vm847, %v846
      %vm849 = vcmp.eq.f32.partialorder %v816, %v818
      %v850 = vsel %vm849, %v813, 128
      %v851 = vand.u32 %v850, 65535
      %v852 = vshra.s32 %v850, 16
      %v853 = vcvt.s32.f32 %v851
      %v854 = vcvt.s32.f32 %v852
      %855 = vmin.xlane.f32.xlu0 %v854
      %v856 = vpop.xlane.xlu0 %855
      %vm857 = vcmp.eq.f32.partialorder %v854, %v856
      %v858 = vsel %vm857, %v853, inf
      %859 = vmin.xlane.f32.xlu0 %v858
      %v860 = vpop.xlane.xlu0 %859
      %v861 = vcvt.f32.s32 %v860
      %v862 = vcvt.f32.s32 %v856
      %v863 = vshll.u32 %v862, 16
      %v864 = vadd.s32 %v863, %v861
      %vm865 = vcmp.eq.s32.totalorder %v864, %v814
      %vm866 = vmand %vm837, %vm865
      %v867 = vsel %vm866, 1, 0
      %vm868 = vcmask 7168
      %v869 = vsel %vm868, %v867, 0
      %v870 = vrot.slane %v869, 4
      %v871 = vadd.s32 %v869, %v870
      %v872 = vrot.slane %v871, 2
      %v873 = vadd.s32 %v871, %v872
      %v874 = vrot.slane %v873, 1
      %v875 = vadd.s32 %v873, %v874
      %876 = vst.msk [vmem:[#allocation11] sm:$0x1] %vm847, %v875
    $region45: #{tpu_custom_call.1} parent=1 // pred_fallthru
      _
    // Predicated region
    $region46: #{tpu_custom_call.1} parent=1 // pred_check
      _
    $region47: #{tpu_custom_call.1} parent=1 // pred_check_branch
      %878 = sbr.rel (0) target = $region49
    $region48: #{tpu_custom_call.1} parent=1 // pred_region
      %s880 = ssub.s32 128, 128
      %881 = vsyncadd [#allocation5], %s880
      %s883 = sshll.u32 [#allocation8], 4
      %s884 = int_to_ptr.vmem [resolvable:$true] %s883
      %886 = dma.vmem_to_hbm [thread:$0]  %s884, 128, %s7, [#allocation5]
    $region49: #{tpu_custom_call.1} parent=1 // pred_fallthru
      _
    // Predicated region
    $region50: #{tpu_custom_call.1} parent=1 // pred_check
      _
    $region51: #{tpu_custom_call.1} parent=1 // pred_check_branch
      %888 = sbr.rel (0) target = $region53
    $region52: #{tpu_custom_call.1} parent=1 // pred_region
      %s890 = ssub.s32 16, 16
      %891 = vsyncadd [#allocation10], %s890
      %s893 = sshll.u32 [#allocation9], 4
      %s894 = int_to_ptr.vmem [resolvable:$true] %s893
      %896 = dma.vmem_to_hbm [thread:$0]  %s894, 16, %s8, [#allocation10]
    $region53: #{tpu_custom_call.1} parent=1 // pred_fallthru
      _
    // Predicated region
    $region54: #{tpu_custom_call.1} parent=1 // pred_check
      _
    $region55: #{tpu_custom_call.1} parent=1 // pred_check_branch
      %898 = sbr.rel (0) target = $region57
    $region56: #{tpu_custom_call.1} parent=1 // pred_region
      %s900 = ssub.s32 16, 16
      %901 = vsyncadd [#allocation10], %s900
      %s903 = sshll.u32 [#allocation11], 4
      %s904 = int_to_ptr.vmem [resolvable:$true] %s903
      %906 = dma.vmem_to_hbm [thread:$0]  %s904, 16, %s9, [#allocation10]
    $region57: #{tpu_custom_call.1} parent=1 // pred_fallthru
      _
    // Predicated region
    $region58: #{tpu_custom_call.1} parent=1 // pred_check
      _
    $region59: #{tpu_custom_call.1} parent=1 // pred_check_branch
      %908 = sbr.rel (0) target = $region61
    $region60: #{tpu_custom_call.1} parent=1 // pred_region
      %909 = dma.done [#allocation5], 128
    $region61: #{tpu_custom_call.1} parent=1 // pred_fallthru
      _
    // Predicated region
    $region62: #{tpu_custom_call.1} parent=1 // pred_check
      _
    $region63: #{tpu_custom_call.1} parent=1 // pred_check_branch
      %911 = sbr.rel (0) target = $region65
    $region64: #{tpu_custom_call.1} parent=1 // pred_region
      %912 = dma.done [#allocation10], 16
    $region65: #{tpu_custom_call.1} parent=1 // pred_fallthru
      _
    // Predicated region
    $region66: #{tpu_custom_call.1} parent=1 // pred_check
      _
    $region67: #{tpu_custom_call.1} parent=1 // pred_check_branch
      %914 = sbr.rel (0) target = $region69
    $region68: #{tpu_custom_call.1} parent=1 // pred_region
      %915 = dma.done [#allocation10], 16
    $region69: #{tpu_custom_call.1} parent=1 // pred_fallthru
      _
    %916 = vsyncpa [#allocation4], 1
    %917 = vsyncpa [#allocation7], 1
    %918 = vsyncpa [#allocation5], 1
    %919 = vsyncpa [#allocation10], 1

</llo_original>
